<compile_context>
chip_gen: v7x
topology: tpu7x:2x2x1
jax: 0.10.0
libtpu: 0.0.40
codegen_flags: <defaults>
</compile_context>

<pallas_src>
import jax
import jax.numpy as jnp
from jax.experimental import pallas as pl
from jax.experimental.pallas import tpu as pltpu

# ---- config (mirrors cfg.* of the PyTorch module) ----
N_NODES = 64            # total nodes in the batch
DIM_IN = 32             # dim_in
DIM_INNER = 32          # cfg.gnn.multi_head_dim_inner
NUM_NODE_TARGETS = 3    # cfg.share.num_node_targets  (pad_node)
NUM_GRAPH_TARGETS = 2   # cfg.share.num_graph_targets (pad_graph)
NUM_GRAPHS = 4
VIRTUAL_NODE = False    # cfg.virtual_node

H_DI = NUM_NODE_TARGETS * DIM_INNER            # 96  (fused node hidden width)
P_COLS = 128                                   # lane-dense packed width
G_PAD = 8                                      # graph rows padded to one sublane tile
OUT_ROWS = N_NODES + NUM_GRAPHS                # 68 meaningful output rows
OUT_ROWS_PAD = N_NODES + G_PAD                 # 72 (multiple of 8) stored rows
OUT_COLS = NUM_NODE_TARGETS + NUM_GRAPH_TARGETS  # 5 meaningful output cols

# packed-parameter row layout (bf16 buffer; every section start is 16-row aligned)
ROW_W1 = 0                                     # rows   0: 32  [w1 (96) | wg1 (32)]
ROW_B1 = 32                                    # row   32     [b1 (96) | bg1 (32)]
ROW_W2 = 48                                    # rows  48:176 packed 2nd layer (128x128):
                                               #   rows 0:96  cols 0:3 = block-diag node w2
                                               #   rows 96:128 cols 3:5 = graph wg2
ROW_B2N = 176                                  # row  176     [b2 (3) | 0 ...]
ROW_B2G = 192                                  # row  192     [0 0 0 | bg2 (2) | 0 ...]
P_ROWS = 208


def hybrid_head_kernel(x_ref, pool_ref, p_ref, pred_ref):
    """Fused node multi-head MLP + mean pooling + graph MLP + pad/stack (lane-dense pred)."""
    N, D = N_NODES, DIM_IN

    # ---- packed-parameter views (static slices of one bf16 VMEM buffer) ----
    w1cat = p_ref[ROW_W1:ROW_W1 + D, :]                                # [32, 128] bf16
    b1cat = p_ref[ROW_B1:ROW_B1 + 1, :].astype(jnp.float32)            # [1, 128]  [b1|bg1]
    w2p = p_ref[ROW_W2:ROW_W2 + P_COLS, :]                             # [128,128] bf16
    b2row = p_ref[ROW_B2N:ROW_B2N + 1, :].astype(jnp.float32)          # [1, 128]  [b2|0..]
    bg2row = p_ref[ROW_B2G:ROW_B2G + 1, :].astype(jnp.float32)         # [1, 128]  [..bg2..]

    # ---- fused first layer: one lane-dense 128-wide bf16 MXU pass, f32 accumulation ----
    x_bf = x_ref[...].astype(jnp.bfloat16)                             # [N, 32]
    hid = jnp.dot(x_bf, w1cat, preferred_element_type=jnp.float32)     # [N, 128] = [node|graph]

    # ---- node rows of the hidden block: ReLU(hid + b1) on lanes 0:96, zero elsewhere ----
    lane_n = jax.lax.broadcasted_iota(jnp.int32, (N, P_COLS), 1)
    node_block = jnp.where(lane_n < H_DI,
                           jnp.maximum(hid + b1cat, 0.0), 0.0)         # [64, 128] f32

    # ---- graph rows: exact mean pooling via precomputed row-normalized one-hot.
    # mean(x) @ wg1 == mean(x @ wg1), so pooling the projected lanes 96:128 is exact;
    # bias+ReLU applied AFTER pooling (pool-before-activation ordering preserved).
    pooled = jnp.dot(pool_ref[...].astype(jnp.bfloat16),
                     hid.astype(jnp.bfloat16),
                     preferred_element_type=jnp.float32)               # [8, 128]
    lane_g = jax.lax.broadcasted_iota(jnp.int32, (G_PAD, P_COLS), 1)
    graph_block = jnp.where(lane_g >= H_DI,
                            jnp.maximum(pooled + b1cat, 0.0), 0.0)     # [8, 128] f32

    # ---- fused second layer + pad/stack: single (72,128)@(128,128) bf16 MXU pass whose
    # result is already in the final lane-padded pred layout (zero-padded w2p columns 5:128
    # keep the padding lanes zero). Row-selected bias finishes node vs graph rows.
    hidden = jnp.concatenate([node_block, graph_block], axis=0).astype(jnp.bfloat16)  # [72,128]
    row = jax.lax.broadcasted_iota(jnp.int32, (OUT_ROWS_PAD, P_COLS), 0)
    bias = jnp.where(row < N, b2row, bg2row)                           # [72, 128]
    pred_ref[...] = jnp.dot(hidden, w2p,
                            preferred_element_type=jnp.float32) + bias  # single full store


@jax.jit
def hybrid_head_forward(x, seg, p_packed, y_node, y_graph):
    G, N = NUM_GRAPHS, N_NODES
    H, Gt = NUM_NODE_TARGETS, NUM_GRAPH_TARGETS

    # Row-normalized one-hot mean-pool matrix, precomputed in XLA (exact division; removes
    # the in-kernel cross-lane count reduce and the approx reciprocal).
    one_hot = (seg[None, :] == jnp.arange(G, dtype=seg.dtype)[:, None]).astype(jnp.float32)
    counts = jnp.sum(one_hot, axis=1, keepdims=True)
    # TODO(synk): empty graph -> 0 rows here; PyTorch mean pooling would give NaN.
    inv_counts = jnp.where(counts > 0.0, 1.0 / counts, 0.0)
    pool = jnp.zeros((G_PAD, N), jnp.float32).at[:G, :].set(one_hot * inv_counts)

    vmem = pl.BlockSpec(memory_space=pltpu.MemorySpace.VMEM)
    flops = int(2 * N * DIM_IN * P_COLS            # fused first layer
                + 2 * G_PAD * N * P_COLS           # mean pooling matmul
                + 2 * OUT_ROWS_PAD * P_COLS * P_COLS)  # fused second layer
    bytes_accessed = int(4 * N * DIM_IN + 4 * G_PAD * N
                         + 2 * P_ROWS * P_COLS
                         + 4 * OUT_ROWS_PAD * P_COLS)

    pred_block = pl.pallas_call(
        hybrid_head_kernel,
        out_shape=jax.ShapeDtypeStruct((OUT_ROWS_PAD, P_COLS), jnp.float32),
        in_specs=[vmem, vmem, vmem],
        out_specs=vmem,
        cost_estimate=pl.CostEstimate(flops=flops, transcendentals=0,
                                      bytes_accessed=bytes_accessed),
    )(x, pool, p_packed)

    # lane/row de-padding is a free XLA layout op outside the kernel
    pred = pred_block[:OUT_ROWS, :OUT_COLS]

    # `true` is pure data movement independent of x -> build it in XLA, not in-kernel
    true = jnp.concatenate([
        jnp.pad(y_node, ((0, 0), (0, Gt))),
        jnp.pad(y_graph, ((0, 0), (H, 0)))], axis=0)
    return pred, true


def init_params(key):
    """PyTorch-Linear-style init; returns (packed bf16 [208,128] buffer, raw f32 params)."""
    H, D, Di, Gt = NUM_NODE_TARGETS, DIM_IN, DIM_INNER, NUM_GRAPH_TARGETS
    ks = jax.random.split(key, 8)
    s1 = 1.0 / float(D) ** 0.5
    s2 = 1.0 / float(Di) ** 0.5
    w1_heads = jax.random.uniform(ks[0], (H, D, Di), jnp.float32, -s1, s1)
    b1_heads = jax.random.uniform(ks[1], (H, Di), jnp.float32, -s1, s1)
    w2_heads = jax.random.uniform(ks[2], (H, Di, 1), jnp.float32, -s2, s2)
    b2_heads = jax.random.uniform(ks[3], (H, 1), jnp.float32, -s2, s2)
    wg1 = jax.random.uniform(ks[4], (D, Di), jnp.float32, -s1, s1)
    bg1 = jax.random.uniform(ks[5], (1, Di), jnp.float32, -s1, s1)
    wg2 = jax.random.uniform(ks[6], (Di, Gt), jnp.float32, -s2, s2)
    bg2 = jax.random.uniform(ks[7], (1, Gt), jnp.float32, -s2, s2)

    # fuse the H node MLPs: first layers side-by-side, second layers block-diagonal
    w1 = jnp.concatenate([w1_heads[h] for h in range(H)], axis=1)          # [D, 96]
    b1 = b1_heads.reshape(1, H * Di)                                       # [1, 96]
    w2 = jnp.zeros((H * Di, H), jnp.float32)
    for h in range(H):
        w2 = w2.at[h * Di:(h + 1) * Di, h].set(w2_heads[h, :, 0])          # block diag
    b2 = b2_heads.reshape(1, H)                                            # [1, H]

    P = jnp.zeros((P_ROWS, P_COLS), jnp.float32)
    P = P.at[ROW_W1:ROW_W1 + D, 0:H_DI].set(w1)
    P = P.at[ROW_W1:ROW_W1 + D, H_DI:H_DI + Di].set(wg1)
    P = P.at[ROW_B1, 0:H_DI].set(b1[0])
    P = P.at[ROW_B1, H_DI:H_DI + Di].set(bg1[0])
    P = P.at[ROW_W2:ROW_W2 + H_DI, 0:H].set(w2)
    P = P.at[ROW_W2 + H_DI:ROW_W2 + H_DI + Di, H:H + Gt].set(wg2)
    P = P.at[ROW_B2N, 0:H].set(b2[0])
    P = P.at[ROW_B2G, H:H + Gt].set(bg2[0])
    P = P.astype(jnp.bfloat16)   # bf16 params: halves the dominant DMA, MXU-native operand

    raw = dict(w1_heads=w1_heads, b1_heads=b1_heads, w2_heads=w2_heads,
               b2_heads=b2_heads, wg1=wg1, bg1=bg1, wg2=wg2, bg2=bg2)
    return P, raw


def reference_forward(x, seg, raw, y_node, y_graph):
    """Pure-JAX f32 replica of the PyTorch forward for verification."""
    H, G = NUM_NODE_TARGETS, NUM_GRAPHS
    cols = []
    for h in range(H):
        hid = jnp.maximum(x @ raw["w1_heads"][h] + raw["b1_heads"][h], 0.0)
        cols.append(hid @ raw["w2_heads"][h] + raw["b2_heads"][h])
    node_pred = jnp.concatenate(cols, axis=1)                               # torch.hstack

    counts = jnp.zeros((G,), jnp.float32).at[seg].add(1.0)
    graph_emb = jnp.zeros((G, DIM_IN), jnp.float32).at[seg].add(x) / counts[:, None]
    gh = jnp.maximum(graph_emb @ raw["wg1"] + raw["bg1"], 0.0)
    graph_pred = gh @ raw["wg2"] + raw["bg2"]

    pred = jnp.concatenate([
        jnp.pad(node_pred, ((0, 0), (0, NUM_GRAPH_TARGETS))),
        jnp.pad(graph_pred, ((0, 0), (NUM_NODE_TARGETS, 0)))], axis=0)
    true = jnp.concatenate([
        jnp.pad(y_node, ((0, 0), (0, NUM_GRAPH_TARGETS))),
        jnp.pad(y_graph, ((0, 0), (NUM_NODE_TARGETS, 0)))], axis=0)
    return pred, true


if __name__ == "__main__":
    key = jax.random.PRNGKey(0)
    kx, ky, kyg, kp = jax.random.split(key, 4)

    x = jax.random.normal(kx, (N_NODES, DIM_IN), jnp.float32)
    seg = jnp.repeat(jnp.arange(NUM_GRAPHS, dtype=jnp.int32), N_NODES // NUM_GRAPHS)
    y_node = jax.random.normal(ky, (N_NODES, NUM_NODE_TARGETS), jnp.float32)
    y_graph = jax.random.normal(kyg, (NUM_GRAPHS, NUM_GRAPH_TARGETS), jnp.float32)
    p_packed, raw = init_params(kp)

    pred, true = hybrid_head_forward(x, seg, p_packed, y_node, y_graph)
    jax.block_until_ready((pred, true))

    ref_pred, ref_true = reference_forward(x, seg, raw, y_node, y_graph)
    assert pred.shape == (N_NODES + NUM_GRAPHS, NUM_NODE_TARGETS + NUM_GRAPH_TARGETS)
    # bf16 params/operands with f32 accumulation -> loosened tolerance vs pure-f32 reference
    assert jnp.allclose(pred, ref_pred, atol=3e-2, rtol=3e-2), (
        float(jnp.max(jnp.abs(pred - ref_pred))))
    assert jnp.allclose(true, ref_true)
    print("KERNEL_OK")
</pallas_src>

<mosaic_0001>
module attributes {stable_mosaic.version = 11 : i64} {
  func.func @hybrid_head_kernel(%arg0: memref<64x32xf32, #tpu.memory_space<vmem>>, %arg1: memref<8x64xf32, #tpu.memory_space<vmem>>, %arg2: memref<208x128xbf16, #tpu.memory_space<vmem>>, %arg3: memref<72x128xf32, #tpu.memory_space<vmem>>) attributes {dimension_semantics = [], scalar_prefetch = 0 : i64, scratch_operands = 0 : i64, tpu.core_type = #tpu.core_type<tc>} {
    %c0 = arith.constant 0 : index
    %c0_0 = arith.constant 0 : index
    %0 = vector.load %arg2[%c0, %c0_0] : memref<208x128xbf16, #tpu.memory_space<vmem>>, vector<32x128xbf16>
    %c32 = arith.constant 32 : index
    %c0_1 = arith.constant 0 : index
    %1 = vector.load %arg2[%c32, %c0_1] : memref<208x128xbf16, #tpu.memory_space<vmem>>, vector<1x128xbf16>
    %2 = arith.extf %1 : vector<1x128xbf16> to vector<1x128xf32>
    %c48 = arith.constant 48 : index
    %c0_2 = arith.constant 0 : index
    %3 = vector.load %arg2[%c48, %c0_2] : memref<208x128xbf16, #tpu.memory_space<vmem>>, vector<128x128xbf16>
    %c176 = arith.constant 176 : index
    %c0_3 = arith.constant 0 : index
    %4 = vector.load %arg2[%c176, %c0_3] : memref<208x128xbf16, #tpu.memory_space<vmem>>, vector<1x128xbf16>
    %5 = arith.extf %4 : vector<1x128xbf16> to vector<1x128xf32>
    %c192 = arith.constant 192 : index
    %c0_4 = arith.constant 0 : index
    %6 = vector.load %arg2[%c192, %c0_4] : memref<208x128xbf16, #tpu.memory_space<vmem>>, vector<1x128xbf16>
    %7 = arith.extf %6 : vector<1x128xbf16> to vector<1x128xf32>
    %c0_5 = arith.constant 0 : index
    %c0_6 = arith.constant 0 : index
    %8 = vector.load %arg0[%c0_5, %c0_6] : memref<64x32xf32, #tpu.memory_space<vmem>>, vector<64x32xf32>
    %9 = arith.truncf %8 : vector<64x32xf32> to vector<64x32xbf16>
    %cst = arith.constant dense<0.000000e+00> : vector<64x128xf32>
    %10 = tpu.matmul %9, %0, %cst {dimension_numbers = #tpu.dot_dimension_numbers<[1], [0], [0], [1], [0, 0, 1, 1], [], []>} : vector<64x32xbf16>, vector<32x128xbf16>, vector<64x128xf32> -> vector<64x128xf32>
    %11 = tpu.iota {dimensions = array<i32: 1>} : vector<64x128xi32>
    %c96_i32 = arith.constant 96 : i32
    %12 = vector.broadcast %c96_i32 : i32 to vector<64x128xi32>
    %13 = arith.cmpi slt, %11, %12 : vector<64x128xi32>
    %14 = vector.broadcast %2 : vector<1x128xf32> to vector<64x128xf32>
    %15 = arith.addf %10, %14 : vector<64x128xf32>
    %cst_7 = arith.constant 0.000000e+00 : f32
    %16 = vector.broadcast %cst_7 : f32 to vector<64x128xf32>
    %17 = arith.maximumf %15, %16 : vector<64x128xf32>
    %cst_8 = arith.constant 0.000000e+00 : f32
    %18 = vector.broadcast %cst_8 : f32 to vector<64x128xf32>
    %19 = arith.select %13, %17, %18 : vector<64x128xi1>, vector<64x128xf32>
    %c0_9 = arith.constant 0 : index
    %c0_10 = arith.constant 0 : index
    %20 = vector.load %arg1[%c0_9, %c0_10] : memref<8x64xf32, #tpu.memory_space<vmem>>, vector<8x64xf32>
    %21 = arith.truncf %20 : vector<8x64xf32> to vector<8x64xbf16>
    %22 = arith.truncf %10 : vector<64x128xf32> to vector<64x128xbf16>
    %cst_11 = arith.constant dense<0.000000e+00> : vector<8x128xf32>
    %23 = tpu.matmul %21, %22, %cst_11 {dimension_numbers = #tpu.dot_dimension_numbers<[1], [0], [0], [1], [0, 0, 1, 1], [], []>} : vector<8x64xbf16>, vector<64x128xbf16>, vector<8x128xf32> -> vector<8x128xf32>
    %24 = tpu.iota {dimensions = array<i32: 1>} : vector<8x128xi32>
    %c96_i32_12 = arith.constant 96 : i32
    %25 = vector.broadcast %c96_i32_12 : i32 to vector<8x128xi32>
    %26 = arith.cmpi sge, %24, %25 : vector<8x128xi32>
    %27 = vector.broadcast %2 : vector<1x128xf32> to vector<8x128xf32>
    %28 = arith.addf %23, %27 : vector<8x128xf32>
    %cst_13 = arith.constant 0.000000e+00 : f32
    %29 = vector.broadcast %cst_13 : f32 to vector<8x128xf32>
    %30 = arith.maximumf %28, %29 : vector<8x128xf32>
    %cst_14 = arith.constant 0.000000e+00 : f32
    %31 = vector.broadcast %cst_14 : f32 to vector<8x128xf32>
    %32 = arith.select %26, %30, %31 : vector<8x128xi1>, vector<8x128xf32>
    %33 = tpu.concatenate %19, %32 in 0 : vector<64x128xf32>, vector<8x128xf32> -> vector<72x128xf32>
    %34 = arith.truncf %33 : vector<72x128xf32> to vector<72x128xbf16>
    %35 = tpu.iota {dimensions = array<i32: 0>} : vector<72x128xi32>
    %c64_i32 = arith.constant 64 : i32
    %36 = vector.broadcast %c64_i32 : i32 to vector<72x128xi32>
    %37 = arith.cmpi slt, %35, %36 : vector<72x128xi32>
    %38 = vector.shape_cast %5 : vector<1x128xf32> to vector<1x128xf32>
    %39 = vector.broadcast %38 : vector<1x128xf32> to vector<72x128xf32>
    %40 = vector.shape_cast %7 : vector<1x128xf32> to vector<1x128xf32>
    %41 = vector.broadcast %40 : vector<1x128xf32> to vector<72x128xf32>
    %42 = arith.select %37, %39, %41 : vector<72x128xi1>, vector<72x128xf32>
    %cst_15 = arith.constant dense<0.000000e+00> : vector<72x128xf32>
    %43 = tpu.matmul %34, %3, %cst_15 {dimension_numbers = #tpu.dot_dimension_numbers<[1], [0], [0], [1], [0, 0, 1, 1], [], []>} : vector<72x128xbf16>, vector<128x128xbf16>, vector<72x128xf32> -> vector<72x128xf32>
    %44 = arith.addf %43, %42 : vector<72x128xf32>
    %c0_16 = arith.constant 0 : index
    %c0_17 = arith.constant 0 : index
    %45 = vector.load %arg3[%c0_16, %c0_17] : memref<72x128xf32, #tpu.memory_space<vmem>>, vector<72x128xf32>
    tpu.vector_store %arg3[%c0_16, %c0_17], %44 {strides = array<i32>} : memref<72x128xf32, #tpu.memory_space<vmem>>, vector<72x128xf32>,
    return
  }
}

</mosaic_0001>

<llo_original>
// kernel: hybrid_head_forward.1
$region0: #{hybrid_head_forward.1}
  #allocation0 [shape = 'u32[]', space=smem, size = 0x4, offset = 0x4, fixed_abs, tag = 'smem constant byte address 0x4 - core index']
  #allocation1 [shape = 'u32[144,128]{1,0:T(1,128)}', space=vmem, size = 0x12000, scoped, tag = 'internal scratch']
  %s0 = inlined_call_operand.vmem [shape: f32[64,32], index: 0, kind: input, shape index: {}]
  %s1 = inlined_call_operand.vmem [shape: f32[8,64], index: 1, kind: input, shape index: {}]
  %s2 = inlined_call_operand.vmem [shape: bf16[208,128], index: 2, kind: input, shape index: {}]
  %s3 = inlined_call_operand.vmem [shape: f32[72,128], index: 3, kind: output, shape index: {}]
  %s4 = sld [smem:[#allocation0]]
  $region22: #{hybrid_head_forward.1} parent=0
    _
  %s6 = ssub.s32 1, %s4
  %s7 = scalar_select 0, %s6, %s4
  // Predicated region
  $region2: #{hybrid_head_forward.1} parent=0 // pred_check
    _
  $region3: #{hybrid_head_forward.1} parent=0 // pred_check_branch
    %9 = sbr.rel (0) target = $region5
  $region4: #{hybrid_head_forward.1} parent=0 // pred_region
    _
  $region5: #{hybrid_head_forward.1} parent=0 // pred_fallthru
    _
  // Predicated region
  $region6: #{hybrid_head_forward.1} parent=0 // pred_check
    _
  $region7: #{hybrid_head_forward.1} parent=0 // pred_check_branch
    %11 = sbr.rel (0) target = $region9
  $region8: #{hybrid_head_forward.1} parent=0 // pred_region
    _
  $region9: #{hybrid_head_forward.1} parent=0 // pred_fallthru
    _
  // Predicated region
  $region10: #{hybrid_head_forward.1} parent=0 // pred_check
    _
  $region11: #{hybrid_head_forward.1} parent=0 // pred_check_branch
    %13 = sbr.rel (0) target = $region13
  $region12: #{hybrid_head_forward.1} parent=0 // pred_region
    _
  $region13: #{hybrid_head_forward.1} parent=0 // pred_fallthru
    _
  %v15 = vld [vmem:[%s2] sm:$0xf]
  %v16 = vld [vmem:[%s2 + $0x4] sm:$0xf]
  %v17 = vld [vmem:[%s2 + $0x8] sm:$0xf]
  %v18 = vld [vmem:[%s2 + $0xc] sm:$0xf]
  %v19 = vld [vmem:[%s2 + $0x10] sm:$0x1]
  %v20 = vunpack.c.l.bf16 %v19
  %v21 = vld [vmem:[%s2 + $0x18] sm:$0xf]
  %v22 = vld [vmem:[%s2 + $0x1c] sm:$0xf]
  %v23 = vld [vmem:[%s2 + $0x20] sm:$0xf]
  %v24 = vld [vmem:[%s2 + $0x24] sm:$0xf]
  %v25 = vld [vmem:[%s2 + $0x28] sm:$0xf]
  %v26 = vld [vmem:[%s2 + $0x2c] sm:$0xf]
  %v27 = vld [vmem:[%s2 + $0x30] sm:$0xf]
  %v28 = vld [vmem:[%s2 + $0x34] sm:$0xf]
  %v29 = vld [vmem:[%s2 + $0x38] sm:$0xf]
  %v30 = vld [vmem:[%s2 + $0x3c] sm:$0xf]
  %v31 = vld [vmem:[%s2 + $0x40] sm:$0xf]
  %v32 = vld [vmem:[%s2 + $0x44] sm:$0xf]
  %v33 = vld [vmem:[%s2 + $0x48] sm:$0xf]
  %v34 = vld [vmem:[%s2 + $0x4c] sm:$0xf]
  %v35 = vld [vmem:[%s2 + $0x50] sm:$0xf]
  %v36 = vld [vmem:[%s2 + $0x54] sm:$0xf]
  %v37 = vld [vmem:[%s2 + $0x58] sm:$0x1]
  %v38 = vunpack.c.l.bf16 %v37
  %v39 = vld [vmem:[%s2 + $0x60] sm:$0x1]
  %v40 = vunpack.c.l.bf16 %v39
  %v41 = vld [vmem:[%s0] sm:$0xff]
  %v42 = vld [vmem:[%s0 + $0x8] sm:$0xff]
  %v43 = vld [vmem:[%s0 + $0x10] sm:$0xff]
  %v44 = vld [vmem:[%s0 + $0x18] sm:$0xff]
  %v45 = vld [vmem:[%s0 + $0x20] sm:$0xff]
  %v46 = vld [vmem:[%s0 + $0x28] sm:$0xff]
  %v47 = vld [vmem:[%s0 + $0x30] sm:$0xff]
  %v48 = vld [vmem:[%s0 + $0x38] sm:$0xff]
  %v49 = vpack.c.bf16 %v42, %v41
  %v50 = vpack.c.bf16 %v44, %v43
  %v51 = vpack.c.bf16 %v46, %v45
  %v52 = vpack.c.bf16 %v48, %v47
  %v57 = vunpack.c.l.b16 %v15
  %v58 = vunpack.c.l.b16 %v16
  %v59 = vunpack.c.l.b16 %v17
  %v60 = vunpack.c.l.b16 %v18
  %v61 = vpack.c.b16 %v58, %v57
  %v62 = vpack.c.b16 %v60, %v59
  %vm65 = vcmask 261120
  %v67 = vsel %vm65, %v49, 0
  %v70 = vsel %vm65, %v50, 0
  %v73 = vsel %vm65, %v51, 0
  %v76 = vsel %vm65, %v52, 0
  %78 = vmatprep.subr.bf16.mxu0 0
  %79 = vmatpush1.bf16.msra.mxu0 %v61
  %80 = vmatprep.subr.bf16.mxu0 0
  %81 = vmatpush1.bf16.msra.mxu0 %v62
  %82 = vmatprep.subr.bf16.mxu0 0
  %83 = vmatpush1.bf16.msra.mxu0 0
  %84 = vmatprep.subr.bf16.mxu0 0
  %85 = vmatpush1.bf16.msra.mxu0 0
  %86 = vmatprep.subr.bf16.mxu0 0
  %87 = vmatpush1.bf16.msra.mxu0 0
  %88 = vmatprep.subr.bf16.mxu0 0
  %89 = vmatpush1.bf16.msra.mxu0 0
  %90 = vmatprep.subr.bf16.mxu0 0
  %91 = vmatpush1.bf16.msra.mxu0 0
  %92 = vmatprep.subr.bf16.mxu0 0
  %93 = vmatpush1.bf16.msra.mxu0 0
  %94 = vmatprep.subr.bf16.mxu0 0
  %95 = vmatpush1.bf16.msra.mxu0 0
  %96 = vmatprep.subr.bf16.mxu0 0
  %97 = vmatpush1.bf16.msra.mxu0 0
  %98 = vmatprep.subr.bf16.mxu0 0
  %99 = vmatpush1.bf16.msra.mxu0 0
  %100 = vmatprep.subr.bf16.mxu0 0
  %101 = vmatpush1.bf16.msra.mxu0 0
  %102 = vmatprep.subr.bf16.mxu0 0
  %103 = vmatpush1.bf16.msra.mxu0 0
  %104 = vmatprep.subr.bf16.mxu0 0
  %105 = vmatpush1.bf16.msra.mxu0 0
  %106 = vmatprep.subr.bf16.mxu0 0
  %107 = vmatpush1.bf16.msra.mxu0 0
  %108 = vmatprep.subr.bf16.mxu0 0
  %109 = vmatpush1.bf16.msra.mxu0 0
  %110 = vmatprep.mubr.bf16.mxu0 0
  %111 = vmatmul.mubr.bf16.gmra.mrb[0].mxu0 %v67
  %v112 = vpop.f32.mrb[0].mxu0
  %v113 = vadd.f32 0.0, %v112
  %v114 = vpop.f32.mrb[0].mxu0
  %v115 = vpop.f32.mrb[0].mxu0
  %v116 = vadd.f32 0.0, %v115
  %v117 = vpop.f32.mrb[0].mxu0
  %118 = vmatprep.mubr.bf16.mxu0 0
  %119 = vmatmul.mubr.bf16.gmra.mrb[0].mxu0 %v70
  %v120 = vpop.f32.mrb[0].mxu0
  %v121 = vadd.f32 0.0, %v120
  %v122 = vpop.f32.mrb[0].mxu0
  %v123 = vpop.f32.mrb[0].mxu0
  %v124 = vadd.f32 0.0, %v123
  %v125 = vpop.f32.mrb[0].mxu0
  %126 = vmatprep.mubr.bf16.mxu0 0
  %127 = vmatmul.mubr.bf16.gmra.mrb[0].mxu0 %v73
  %v128 = vpop.f32.mrb[0].mxu0
  %v129 = vadd.f32 0.0, %v128
  %v130 = vpop.f32.mrb[0].mxu0
  %v131 = vpop.f32.mrb[0].mxu0
  %v132 = vadd.f32 0.0, %v131
  %v133 = vpop.f32.mrb[0].mxu0
  %134 = vmatprep.mubr.bf16.mxu0 0
  %135 = vmatmul.mubr.bf16.gmra.mrb[0].mxu0 %v76
  %v136 = vpop.f32.mrb[0].mxu0
  %v137 = vadd.f32 0.0, %v136
  %v138 = vpop.f32.mrb[0].mxu0
  %v139 = vpop.f32.mrb[0].mxu0
  %v140 = vadd.f32 0.0, %v139
  %v141 = vpop.f32.mrb[0].mxu0
  %142 = vdwg.mxu0
  %v143 = vlaneseq
  %v144 = vand.u32 %v143, 127
  %vm145 = vcmp.lt.s32.totalorder %v144, 96
  %v146 = vlaneseq
  %v147 = vshrl.u32 %v146, 7
  %v148 = vsub.s32 0, %v147
  %v149 = vrot.slane %v20, %v148
  %v150 = vadd.f32 %v113, %v149
  %v151 = vadd.f32 %v116, %v149
  %v152 = vadd.f32 %v121, %v149
  %v153 = vadd.f32 %v124, %v149
  %v154 = vadd.f32 %v129, %v149
  %v155 = vadd.f32 %v132, %v149
  %v156 = vadd.f32 %v137, %v149
  %v157 = vadd.f32 %v140, %v149
  %v158 = vmax.f32 %v150, 0.0
  %v159 = vmax.f32 %v151, 0.0
  %v160 = vmax.f32 %v152, 0.0
  %v161 = vmax.f32 %v153, 0.0
  %v162 = vmax.f32 %v154, 0.0
  %v163 = vmax.f32 %v155, 0.0
  %v164 = vmax.f32 %v156, 0.0
  %v165 = vmax.f32 %v157, 0.0
  %v166 = vsel %vm145, %v158, 0.0
  %v167 = vsel %vm145, %v159, 0.0
  %v168 = vsel %vm145, %v160, 0.0
  %v169 = vsel %vm145, %v161, 0.0
  %v170 = vsel %vm145, %v162, 0.0
  %v171 = vsel %vm145, %v163, 0.0
  %v172 = vsel %vm145, %v164, 0.0
  %v173 = vsel %vm145, %v165, 0.0
  %v174 = vld [vmem:[%s1] sm:$0xff]
  %v175 = vpack.c.bf16 %v174, %v174
  %v176 = vpack.c.bf16 %v116, %v113
  %v177 = vpack.c.bf16 %v124, %v121
  %v178 = vpack.c.bf16 %v132, %v129
  %v179 = vpack.c.bf16 %v140, %v137
  %vm180 = vcmp.ge.s32.totalorder %v144, 96
  %vm181 = vcmask 523264
  %v183 = vsel %vm181, %v175, 0
  %185 = vmatprep.subr.bf16.mxu0 0
  %186 = vmatpush1.bf16.msra.mxu0 %v176
  %187 = vmatprep.subr.bf16.mxu0 0
  %188 = vmatpush1.bf16.msra.mxu0 %v177
  %189 = vmatprep.subr.bf16.mxu0 0
  %190 = vmatpush1.bf16.msra.mxu0 %v178
  %191 = vmatprep.subr.bf16.mxu0 0
  %192 = vmatpush1.bf16.msra.mxu0 %v179
  %193 = vmatprep.subr.bf16.mxu0 0
  %194 = vmatpush1.bf16.msra.mxu0 0
  %195 = vmatprep.subr.bf16.mxu0 0
  %196 = vmatpush1.bf16.msra.mxu0 0
  %197 = vmatprep.subr.bf16.mxu0 0
  %198 = vmatpush1.bf16.msra.mxu0 0
  %199 = vmatprep.subr.bf16.mxu0 0
  %200 = vmatpush1.bf16.msra.mxu0 0
  %201 = vmatprep.subr.bf16.mxu0 0
  %202 = vmatpush1.bf16.msra.mxu0 0
  %203 = vmatprep.subr.bf16.mxu0 0
  %204 = vmatpush1.bf16.msra.mxu0 0
  %205 = vmatprep.subr.bf16.mxu0 0
  %206 = vmatpush1.bf16.msra.mxu0 0
  %207 = vmatprep.subr.bf16.mxu0 0
  %208 = vmatpush1.bf16.msra.mxu0 0
  %209 = vmatprep.subr.bf16.mxu0 0
  %210 = vmatpush1.bf16.msra.mxu0 0
  %211 = vmatprep.subr.bf16.mxu0 0
  %212 = vmatpush1.bf16.msra.mxu0 0
  %213 = vmatprep.subr.bf16.mxu0 0
  %214 = vmatpush1.bf16.msra.mxu0 0
  %215 = vmatprep.subr.bf16.mxu0 0
  %216 = vmatpush1.bf16.msra.mxu0 0
  %217 = vmatprep.mubr.bf16.mxu0 0
  %218 = vmatmul.mubr.bf16.gmra.mrb[0].mxu0 %v183
  %v219 = vpop.f32.mrb[0].mxu0
  %v220 = vadd.f32 %v149, %v219
  %v221 = vpop.f32.mrb[0].mxu0
  %v222 = vpop.f32.mrb[0].mxu0
  %v223 = vpop.f32.mrb[0].mxu0
  %224 = vdwg.mxu0
  %v225 = vmax.f32 %v220, 0.0
  %v226 = vsel %vm180, %v225, 0.0
  %v227 = vpack.c.bf16 %v167, %v166
  %v228 = vpack.c.bf16 %v169, %v168
  %v229 = vpack.c.bf16 %v171, %v170
  %v230 = vpack.c.bf16 %v173, %v172
  %v231 = vpack.c.bf16 %v226, %v226
  %v232 = vlaneseq
  %v233 = vshrl.u32 %v232, 7
  %v234 = vadd.s32 %v233, 8
  %v235 = vadd.s32 %v233, 16
  %v236 = vadd.s32 %v233, 24
  %v237 = vadd.s32 %v233, 32
  %v238 = vadd.s32 %v233, 40
  %v239 = vadd.s32 %v233, 48
  %v240 = vadd.s32 %v233, 56
  %v241 = vadd.s32 %v233, 64
  %vm242 = vcmp.lt.s32.totalorder %v233, 64
  %vm243 = vcmp.lt.s32.totalorder %v234, 64
  %vm244 = vcmp.lt.s32.totalorder %v235, 64
  %vm245 = vcmp.lt.s32.totalorder %v236, 64
  %vm246 = vcmp.lt.s32.totalorder %v237, 64
  %vm247 = vcmp.lt.s32.totalorder %v238, 64
  %vm248 = vcmp.lt.s32.totalorder %v239, 64
  %vm249 = vcmp.lt.s32.totalorder %v240, 64
  %vm250 = vcmp.lt.s32.totalorder %v241, 64
  %v251 = vlaneseq
  %v252 = vshrl.u32 %v251, 7
  %v253 = vsub.s32 0, %v252
  %v254 = vrot.slane %v38, %v253
  %v255 = vlaneseq
  %v256 = vshrl.u32 %v255, 7
  %v257 = vsub.s32 0, %v256
  %v258 = vrot.slane %v40, %v257
  %v259 = vsel %vm242, %v254, %v258
  %v260 = vsel %vm243, %v254, %v258
  %v261 = vsel %vm244, %v254, %v258
  %v262 = vsel %vm245, %v254, %v258
  %v263 = vsel %vm246, %v254, %v258
  %v264 = vsel %vm247, %v254, %v258
  %v265 = vsel %vm248, %v254, %v258
  %v266 = vsel %vm249, %v254, %v258
  %v267 = vsel %vm250, %v254, %v258
  %v284 = vunpack.c.l.b16 %v21
  %v285 = vunpack.c.l.b16 %v22
  %v286 = vunpack.c.l.b16 %v23
  %v287 = vunpack.c.l.b16 %v24
  %v288 = vunpack.c.l.b16 %v25
  %v289 = vunpack.c.l.b16 %v26
  %v290 = vunpack.c.l.b16 %v27
  %v291 = vunpack.c.l.b16 %v28
  %v292 = vunpack.c.l.b16 %v29
  %v293 = vunpack.c.l.b16 %v30
  %v294 = vunpack.c.l.b16 %v31
  %v295 = vunpack.c.l.b16 %v32
  %v296 = vunpack.c.l.b16 %v33
  %v297 = vunpack.c.l.b16 %v34
  %v298 = vunpack.c.l.b16 %v35
  %v299 = vunpack.c.l.b16 %v36
  %v300 = vpack.c.b16 %v285, %v284
  %v301 = vpack.c.b16 %v287, %v286
  %v302 = vpack.c.b16 %v289, %v288
  %v303 = vpack.c.b16 %v291, %v290
  %v304 = vpack.c.b16 %v293, %v292
  %v305 = vpack.c.b16 %v295, %v294
  %v306 = vpack.c.b16 %v297, %v296
  %v307 = vpack.c.b16 %v299, %v298
  %316 = vmatprep.subr.bf16.mxu0 0
  %317 = vmatpush1.bf16.msra.mxu0 %v300
  %318 = vmatprep.subr.bf16.mxu0 0
  %319 = vmatpush1.bf16.msra.mxu0 %v301
  %320 = vmatprep.subr.bf16.mxu0 0
  %321 = vmatpush1.bf16.msra.mxu0 %v302
  %322 = vmatprep.subr.bf16.mxu0 0
  %323 = vmatpush1.bf16.msra.mxu0 %v303
  %324 = vmatprep.subr.bf16.mxu0 0
  %325 = vmatpush1.bf16.msra.mxu0 %v304
  %326 = vmatprep.subr.bf16.mxu0 0
  %327 = vmatpush1.bf16.msra.mxu0 %v305
  %328 = vmatprep.subr.bf16.mxu0 0
  %329 = vmatpush1.bf16.msra.mxu0 %v306
  %330 = vmatprep.subr.bf16.mxu0 0
  %331 = vmatpush1.bf16.msra.mxu0 %v307
  %332 = vmatprep.subr.bf16.mxu0 0
  %333 = vmatpush1.bf16.msra.mxu0 0
  %334 = vmatprep.subr.bf16.mxu0 0
  %335 = vmatpush1.bf16.msra.mxu0 0
  %336 = vmatprep.subr.bf16.mxu0 0
  %337 = vmatpush1.bf16.msra.mxu0 0
  %338 = vmatprep.subr.bf16.mxu0 0
  %339 = vmatpush1.bf16.msra.mxu0 0
  %340 = vmatprep.subr.bf16.mxu0 0
  %341 = vmatpush1.bf16.msra.mxu0 0
  %342 = vmatprep.subr.bf16.mxu0 0
  %343 = vmatpush1.bf16.msra.mxu0 0
  %344 = vmatprep.subr.bf16.mxu0 0
  %345 = vmatpush1.bf16.msra.mxu0 0
  %346 = vmatprep.subr.bf16.mxu0 0
  %347 = vmatpush1.bf16.msra.mxu0 0
  %348 = vmatprep.mubr.bf16.mxu0 0
  %349 = vmatmul.mubr.bf16.gmra.mrb[0].mxu0 %v227
  %v350 = vpop.f32.mrb[0].mxu0
  %v351 = vadd.f32 %v259, %v350
  %v352 = vpop.f32.mrb[0].mxu0
  %v353 = vpop.f32.mrb[0].mxu0
  %v354 = vadd.f32 %v260, %v353
  %v355 = vpop.f32.mrb[0].mxu0
  %356 = vmatprep.mubr.bf16.mxu0 0
  %357 = vmatmul.mubr.bf16.gmra.mrb[0].mxu0 %v228
  %v358 = vpop.f32.mrb[0].mxu0
  %v359 = vadd.f32 %v261, %v358
  %v360 = vpop.f32.mrb[0].mxu0
  %v361 = vpop.f32.mrb[0].mxu0
  %v362 = vadd.f32 %v262, %v361
  %v363 = vpop.f32.mrb[0].mxu0
  %364 = vmatprep.mubr.bf16.mxu0 0
  %365 = vmatmul.mubr.bf16.gmra.mrb[0].mxu0 %v229
  %v366 = vpop.f32.mrb[0].mxu0
  %v367 = vadd.f32 %v263, %v366
  %v368 = vpop.f32.mrb[0].mxu0
  %v369 = vpop.f32.mrb[0].mxu0
  %v370 = vadd.f32 %v264, %v369
  %v371 = vpop.f32.mrb[0].mxu0
  %372 = vmatprep.mubr.bf16.mxu0 0
  %373 = vmatmul.mubr.bf16.gmra.mrb[0].mxu0 %v230
  %v374 = vpop.f32.mrb[0].mxu0
  %v375 = vadd.f32 %v265, %v374
  %v376 = vpop.f32.mrb[0].mxu0
  %v377 = vpop.f32.mrb[0].mxu0
  %v378 = vadd.f32 %v266, %v377
  %v379 = vpop.f32.mrb[0].mxu0
  %380 = vmatprep.mubr.bf16.mxu0 0
  %381 = vmatmul.mubr.bf16.gmra.mrb[0].mxu0 %v231
  %v382 = vpop.f32.mrb[0].mxu0
  %v383 = vadd.f32 %v267, %v382
  %v384 = vpop.f32.mrb[0].mxu0
  %v385 = vpop.f32.mrb[0].mxu0
  %v386 = vpop.f32.mrb[0].mxu0
  %387 = vdwg.mxu0
  %388 = vst [vmem:[%s3] sm:$0xff] %v351
  %389 = vst [vmem:[%s3 + $0x8] sm:$0xff] %v354
  %390 = vst [vmem:[%s3 + $0x10] sm:$0xff] %v359
  %391 = vst [vmem:[%s3 + $0x18] sm:$0xff] %v362
  %392 = vst [vmem:[%s3 + $0x20] sm:$0xff] %v367
  %393 = vst [vmem:[%s3 + $0x28] sm:$0xff] %v370
  %394 = vst [vmem:[%s3 + $0x30] sm:$0xff] %v375
  %395 = vst [vmem:[%s3 + $0x38] sm:$0xff] %v378
  %396 = vst [vmem:[%s3 + $0x40] sm:$0xff] %v383
  // Predicated region
  $region14: #{hybrid_head_forward.1} parent=0 // pred_check
    _
  $region15: #{hybrid_head_forward.1} parent=0 // pred_check_branch
    %398 = sbr.rel (0) target = $region17
  $region16: #{hybrid_head_forward.1} parent=0 // pred_region
    _
  $region17: #{hybrid_head_forward.1} parent=0 // pred_fallthru
    _
  // Predicated region
  $region18: #{hybrid_head_forward.1} parent=0 // pred_check
    _
  $region19: #{hybrid_head_forward.1} parent=0 // pred_check_branch
    %400 = sbr.rel (0) target = $region21
  $region20: #{hybrid_head_forward.1} parent=0 // pred_region
    _
  $region21: #{hybrid_head_forward.1} parent=0 // pred_fallthru
    _

</llo_original>
